<compile_context>
chip_gen: v6e
topology: v6e:2x2x1
jax: 0.10.0
libtpu: 0.0.40
codegen_flags: <defaults>
</compile_context>

<pallas_src>
import functools

import jax
import jax.numpy as jnp
import numpy as np
from jax.experimental import pallas as pl
from jax.experimental.pallas import tpu as pltpu

DSU_EPS = 1e-6
BN_EPS = 1e-5


# ---------------------------------------------------------------------------
# Shared: fold per-(n,c) statistics into the fused affine out = x*A + B.
# Works on tiny O(N*C) arrays, both inside the kernel and in the wrapper.
# ---------------------------------------------------------------------------
def _fold_affine(mean, var, n1, n2, w, bb, hw):
    """All args broadcast-compatible with `mean` (batch axis 0, float32).
    `hw` is the TRUE spatial element count (Python int)."""
    n = mean.shape[0]
    std = jnp.sqrt(var + DSU_EPS)

    # DSU "sqrtvar" over the batch dim (unbiased, like torch.var default).
    mu_bar = jnp.mean(mean, axis=0, keepdims=True)
    sqrtvar_mu = jnp.sqrt(
        jnp.sum(jnp.square(mean - mu_bar), axis=0, keepdims=True) / (n - 1) + DSU_EPS)
    std_bar = jnp.mean(std, axis=0, keepdims=True)
    sqrtvar_std = jnp.sqrt(
        jnp.sum(jnp.square(std - std_bar), axis=0, keepdims=True) / (n - 1) + DSU_EPS)

    # Reparameterized beta / gamma (externally supplied gaussian noise).
    beta = mean + n1 * sqrtvar_mu
    gamma = std + n2 * sqrtvar_std

    # DSU as per-(n,c) affine y = a*x + b.  rsqrt == 1/std exactly here
    # (std = sqrt(var + eps)) and runs on the EUP instead of a VALU divide.
    inv_std = jax.lax.rsqrt(var + DSU_EPS)
    a = gamma * inv_std
    b = beta - mean * a

    # BatchNorm batch statistics derived algebraically (no big-tensor pass):
    # per-sample spatial mean of y is beta; spatial biased var is a^2*var_b.
    ch_mean = jnp.mean(beta, axis=0, keepdims=True)
    var_biased = var * ((hw - 1.0) / hw)
    ch_var = jnp.mean(a * a * var_biased + jnp.square(beta - ch_mean),
                      axis=0, keepdims=True)
    s = jax.lax.rsqrt(ch_var + BN_EPS)

    A = a * s * w
    B = (b - ch_mean) * s * w + bb
    return A, B


# ---------------------------------------------------------------------------
# Kernels
# ---------------------------------------------------------------------------
def _dsu_bn_fused_kernel(x_ref, n1_ref, n2_ref, w_ref, b_ref, o_ref, *, hw):
    """Single-pass kernel: one block = (N, TC, HWp), full batch & spatial."""
    x_in = x_ref[...]                                    # (N, TC, HWp) native
    xf = x_in.astype(jnp.float32)

    # One fused reduction pass: sum & sum-of-squares.  Zero padding in the
    # lane tail contributes nothing; divide by the true hw.
    xsum = jnp.sum(xf, axis=-1, keepdims=True)            # (N, TC, 1)
    xsq = jnp.sum(xf * xf, axis=-1, keepdims=True)        # (N, TC, 1)
    mean = xsum * (1.0 / hw)
    var = jnp.maximum(xsq - hw * mean * mean, 0.0) * (1.0 / (hw - 1.0))

    A, B = _fold_affine(mean, var,
                        n1_ref[...].astype(jnp.float32),
                        n2_ref[...].astype(jnp.float32),
                        w_ref[...].astype(jnp.float32),
                        b_ref[...].astype(jnp.float32), hw)

    # Final fused affine: exactly one FMA per element of the big tensor.
    if x_in.dtype == jnp.bfloat16:
        # bf16 apply path: halves vreg/VMEM traffic (stats stayed in f32).
        o_ref[...] = (x_in * A.astype(jnp.bfloat16)
                      + B.astype(jnp.bfloat16)).astype(o_ref.dtype)
    else:
        o_ref[...] = (xf * A + B).astype(o_ref.dtype)


def _dsu_stats_kernel(x_ref, sum_ref, sq_ref):
    """Two-phase, phase 1: accumulate per-(n,c) sum / sumsq over HW tiles.
    Outputs are resident across the 'arbitrary' HW grid axis (P3 pattern)."""
    h = pl.program_id(1)

    @pl.when(h == 0)
    def _():
        sum_ref[...] = jnp.zeros_like(sum_ref)
        sq_ref[...] = jnp.zeros_like(sq_ref)

    xf = x_ref[...].astype(jnp.float32)
    sum_ref[...] += jnp.sum(xf, axis=-1, keepdims=True)
    sq_ref[...] += jnp.sum(xf * xf, axis=-1, keepdims=True)


def _dsu_apply_kernel(x_ref, a_ref, b_ref, o_ref):
    """Two-phase, phase 2: out = x * A + B (per-(n,c) affine)."""
    x_in = x_ref[...]
    if x_in.dtype == jnp.bfloat16:
        o_ref[...] = (x_in * a_ref[...].astype(jnp.bfloat16)
                      + b_ref[...].astype(jnp.bfloat16)).astype(o_ref.dtype)
    else:
        o_ref[...] = (x_in.astype(jnp.float32) * a_ref[...]
                      + b_ref[...]).astype(o_ref.dtype)


# ---------------------------------------------------------------------------
# Tile / budget selection
# ---------------------------------------------------------------------------
def _vmem_budget():
    """(physical VMEM bytes, per-block byte budget) sized per generation."""
    try:
        phys = int(getattr(pltpu.get_tpu_info(), "vmem_capacity_bytes", 64 << 20))
    except Exception:
        phys = 64 << 20                       # conservative (v7x-sized) default
    if phys >= (100 << 20):                   # v5e / v6e: 128 MiB VMEM
        return phys, 6 << 20
    return phys, 3 << 20                      # v7x: 64 MiB per TensorCore


def _vmem_limit(phys, block_bytes):
    """Explicit scoped-VMEM limit: double-buffered in+out blocks + headroom."""
    return int(min(phys * 3 // 4, max(32 << 20, 6 * block_bytes + (16 << 20))))


def _pick_block_c(C, N, HWp, itemsize, budget_bytes):
    """Channel tile for the fused path: a divisor of C that is a multiple of 8
    (or C itself), fits the per-block budget with the full (N, HWp) extent,
    stays <= 256 (keeps the (N,TC,1) sublane stat math cheap), and leaves
    >= 2 grid steps when C >= 16 so both v7x TensorCores get work.
    Returns None if even the smallest legal tile does not fit."""
    per_channel = N * HWp * itemsize
    cands = sorted({d for d in range(8, C, 8) if C % d == 0} | {C})
    fitting = [d for d in cands if d * per_channel <= budget_bytes]
    if not fitting:
        return None
    cap = 256
    if C >= 16:
        cap = min(cap, C // 2)
    under = [d for d in fitting if d <= cap]
    return max(under) if under else min(fitting)


def _pick_block_hw(HWp, N, tc, itemsize, budget_bytes):
    """Spatial tile for the two-phase path: a multiple of 128 dividing HWp."""
    m = HWp // 128
    per_unit = N * tc * 128 * itemsize
    d_fit = max(1, budget_bytes // per_unit)
    d = max(dd for dd in range(1, m + 1) if m % dd == 0 and dd <= d_fit)
    return 128 * d


# ---------------------------------------------------------------------------
# Wrapper
# ---------------------------------------------------------------------------
def dsu_bn(x, noise_mu, noise_std, bn_weight, bn_bias, *,
           block_c=None, block_hw=None, force_two_phase=False):
    """DSU_BN forward, training path.

    x: (N, C, H, W) NCHW like the PyTorch module.  noise_mu / noise_std:
    (N, C) standard-normal draws replacing torch.randn_like.  bn_*: (C,).
    """
    N, C, H, W = x.shape
    HW = H * W
    if N < 2 or HW < 2:
        raise ValueError("DSU_BN training forward needs N >= 2 and H*W >= 2 "
                         "(unbiased variance divisors N-1 and HW-1).")
    itemsize = jnp.dtype(x.dtype).itemsize

    # Lane-dense layout: pad the flattened spatial axis to a multiple of 128.
    # Zero padding is exact for the sum/sumsq statistics (true HW divides);
    # padded output columns are sliced away below.
    HWp = HW if HW % 128 == 0 else ((HW + 127) // 128) * 128
    xr = x.reshape(N, C, HW)
    if HWp != HW:
        xr = jnp.pad(xr, ((0, 0), (0, 0), (0, HWp - HW)))

    phys_vmem, budget = _vmem_budget()

    if block_c is not None:
        if C % block_c != 0 or not (block_c == C or block_c % 8 == 0):
            raise ValueError(f"block_c={block_c} must divide C={C} and be a "
                             "multiple of 8 (or equal C).")
    if block_hw is not None:
        if HWp % block_hw != 0 or block_hw % 128 != 0:
            raise ValueError(f"block_hw={block_hw} must divide padded HW={HWp} "
                             "and be a multiple of 128.")

    tc_fused = block_c if block_c is not None else _pick_block_c(
        C, N, HWp, itemsize, budget)
    use_fused = (not force_two_phase) and (block_hw is None) and (tc_fused is not None)

    if use_fused:
        tc = tc_fused
        block_bytes = N * tc * HWp * itemsize
        n1 = noise_mu.reshape(N, C, 1).astype(jnp.float32)
        n2 = noise_std.reshape(N, C, 1).astype(jnp.float32)
        wv = bn_weight.reshape(1, C, 1).astype(jnp.float32)
        bv = bn_bias.reshape(1, C, 1).astype(jnp.float32)

        out = pl.pallas_call(
            functools.partial(_dsu_bn_fused_kernel, hw=HW),
            out_shape=jax.ShapeDtypeStruct((N, C, HWp), x.dtype),
            grid=(C // tc,),
            in_specs=[
                pl.BlockSpec((N, tc, HWp), lambda c: (0, c, 0)),   # x
                pl.BlockSpec((N, tc, 1), lambda c: (0, c, 0)),     # noise_mu
                pl.BlockSpec((N, tc, 1), lambda c: (0, c, 0)),     # noise_std
                pl.BlockSpec((1, tc, 1), lambda c: (0, c, 0)),     # bn weight
                pl.BlockSpec((1, tc, 1), lambda c: (0, c, 0)),     # bn bias
            ],
            out_specs=pl.BlockSpec((N, tc, HWp), lambda c: (0, c, 0)),
            compiler_params=pltpu.CompilerParams(
                dimension_semantics=("parallel",),
                vmem_limit_bytes=_vmem_limit(phys_vmem, block_bytes)),
            cost_estimate=pl.CostEstimate(
                flops=5 * N * C * HWp,
                transcendentals=4 * N * C,
                bytes_accessed=2 * N * C * HWp * itemsize),
        )(xr, n1, n2, wv, bv)
    else:
        # Two-phase path: stats accumulate over HW tiles, fold tiny O(N*C)
        # statistics in plain JAX, then a tiled apply sweep.
        tc = block_c if block_c is not None else (8 if C % 8 == 0 else C)
        thw = block_hw if block_hw is not None else _pick_block_hw(
            HWp, N, tc, itemsize, budget)
        block_bytes = N * tc * thw * itemsize
        if block_bytes > 4 * budget:
            # TODO(synk): add batch (N) tiling for extreme N / non-8-divisible C.
            raise ValueError(
                f"DSU_BN: minimal legal tile (N={N}, tc={tc}, thw={thw}) is "
                f"{block_bytes / 2**20:.1f} MiB and exceeds the VMEM budget.")
        vlim = _vmem_limit(phys_vmem, block_bytes)
        grid2 = (C // tc, HWp // thw)

        xsum, xsq = pl.pallas_call(
            _dsu_stats_kernel,
            out_shape=(jax.ShapeDtypeStruct((N, C, 1), jnp.float32),
                       jax.ShapeDtypeStruct((N, C, 1), jnp.float32)),
            grid=grid2,
            in_specs=[pl.BlockSpec((N, tc, thw), lambda c, h: (0, c, h))],
            out_specs=[pl.BlockSpec((N, tc, 1), lambda c, h: (0, c, 0)),
                       pl.BlockSpec((N, tc, 1), lambda c, h: (0, c, 0))],
            compiler_params=pltpu.CompilerParams(
                dimension_semantics=("parallel", "arbitrary"),
                vmem_limit_bytes=vlim),
            cost_estimate=pl.CostEstimate(
                flops=3 * N * C * HWp,
                transcendentals=0,
                bytes_accessed=N * C * HWp * itemsize),
        )(xr)

        mean = xsum[:, :, 0] * (1.0 / HW)                                 # (N,C)
        var = jnp.maximum(xsq[:, :, 0] - HW * mean * mean, 0.0) * (1.0 / (HW - 1.0))
        A, B = _fold_affine(mean, var,
                            noise_mu.astype(jnp.float32),
                            noise_std.astype(jnp.float32),
                            bn_weight.astype(jnp.float32)[None, :],
                            bn_bias.astype(jnp.float32)[None, :], HW)
        A = A.reshape(N, C, 1)
        B = B.reshape(N, C, 1)

        out = pl.pallas_call(
            _dsu_apply_kernel,
            out_shape=jax.ShapeDtypeStruct((N, C, HWp), x.dtype),
            grid=grid2,
            in_specs=[
                pl.BlockSpec((N, tc, thw), lambda c, h: (0, c, h)),
                pl.BlockSpec((N, tc, 1), lambda c, h: (0, c, 0)),
                pl.BlockSpec((N, tc, 1), lambda c, h: (0, c, 0)),
            ],
            out_specs=pl.BlockSpec((N, tc, thw), lambda c, h: (0, c, h)),
            compiler_params=pltpu.CompilerParams(
                dimension_semantics=("parallel", "parallel"),
                vmem_limit_bytes=vlim),
            cost_estimate=pl.CostEstimate(
                flops=2 * N * C * HWp,
                transcendentals=0,
                bytes_accessed=2 * N * C * HWp * itemsize),
        )(xr, A, B)

    if HWp != HW:
        out = out[:, :, :HW]
    return out.reshape(N, C, H, W)


# ---------------------------------------------------------------------------
# Pure-JAX reference mirroring the PyTorch forward (training path).
# ---------------------------------------------------------------------------
def ref_dsu_bn(x, noise_mu, noise_std, bn_weight, bn_bias):
    mean = x.mean(axis=(2, 3))                                   # (N,C)
    std = jnp.sqrt(x.var(axis=(2, 3), ddof=1) + DSU_EPS)         # (N,C)
    sqrtvar_mu = jnp.sqrt(mean.var(axis=0, ddof=1) + DSU_EPS)    # (C,)
    sqrtvar_std = jnp.sqrt(std.var(axis=0, ddof=1) + DSU_EPS)    # (C,)
    beta = mean + noise_mu * sqrtvar_mu
    gamma = std + noise_std * sqrtvar_std
    y = (x - mean[:, :, None, None]) / std[:, :, None, None]
    y = y * gamma[:, :, None, None] + beta[:, :, None, None]
    ch_mean = y.mean(axis=(0, 2, 3))
    ch_var = y.var(axis=(0, 2, 3))                               # biased
    out = (y - ch_mean[None, :, None, None]) * \
        jax.lax.rsqrt(ch_var + BN_EPS)[None, :, None, None]
    return out * bn_weight[None, :, None, None] + bn_bias[None, :, None, None]


if __name__ == "__main__":
    key = jax.random.PRNGKey(0)
    kx, k1, k2, kx2, k3, k4 = jax.random.split(key, 6)

    # Main case (small shapes consistent with the module): N=2, C=4, 16x16.
    N, C, H, W = 2, 4, 16, 16
    x = jax.random.normal(kx, (N, C, H, W), dtype=jnp.float32) * 2.0 + 0.5
    noise_mu = jax.random.normal(k1, (N, C), dtype=jnp.float32)
    noise_std = jax.random.normal(k2, (N, C), dtype=jnp.float32)
    bn_w = jnp.ones((C,), dtype=jnp.float32)    # BatchNorm2d default init
    bn_b = jnp.zeros((C,), dtype=jnp.float32)

    ref = ref_dsu_bn(x, noise_mu, noise_std, bn_w, bn_b)

    # 1) fused single-pass path
    out = jax.block_until_ready(dsu_bn(x, noise_mu, noise_std, bn_w, bn_b))
    np.testing.assert_allclose(np.asarray(out), np.asarray(ref),
                               rtol=2e-3, atol=2e-3)

    # 2) two-phase (stats + apply) fallback, forced, with HW tiling
    out2 = jax.block_until_ready(
        dsu_bn(x, noise_mu, noise_std, bn_w, bn_b,
               force_two_phase=True, block_hw=128))
    np.testing.assert_allclose(np.asarray(out2), np.asarray(ref),
                               rtol=2e-3, atol=2e-3)

    # 3) non-lane-dense spatial map (7x7 -> padded to 128) through fused path
    N3, C3, H3, W3 = 2, 8, 7, 7
    x3 = jax.random.normal(kx2, (N3, C3, H3, W3), dtype=jnp.float32) + 0.25
    nm3 = jax.random.normal(k3, (N3, C3), dtype=jnp.float32)
    ns3 = jax.random.normal(k4, (N3, C3), dtype=jnp.float32)
    w3 = jnp.ones((C3,), dtype=jnp.float32)
    b3 = jnp.zeros((C3,), dtype=jnp.float32)
    out3 = jax.block_until_ready(dsu_bn(x3, nm3, ns3, w3, b3))
    ref3 = ref_dsu_bn(x3, nm3, ns3, w3, b3)
    np.testing.assert_allclose(np.asarray(out3), np.asarray(ref3),
                               rtol=2e-3, atol=2e-3)

    # 4) bf16 input -> bf16 apply path (statistics stay in f32)
    xb = x.astype(jnp.bfloat16)
    outb = jax.block_until_ready(dsu_bn(xb, noise_mu, noise_std, bn_w, bn_b))
    refb = ref_dsu_bn(xb.astype(jnp.float32), noise_mu, noise_std, bn_w, bn_b)
    np.testing.assert_allclose(np.asarray(outb).astype(np.float32),
                               np.asarray(refb), rtol=1e-1, atol=1e-1)

    print("KERNEL_OK")
</pallas_src>

<mosaic_0001>
module attributes {stable_mosaic.version = 11 : i64} {
  func.func @_dsu_bn_fused_kernel(%arg0: i32, %arg1: memref<2x4x256xf32, #tpu.memory_space<vmem>>, %arg2: memref<2x4x1xf32, #tpu.memory_space<vmem>>, %arg3: memref<2x4x1xf32, #tpu.memory_space<vmem>>, %arg4: memref<1x4x1xf32, #tpu.memory_space<vmem>>, %arg5: memref<1x4x1xf32, #tpu.memory_space<vmem>>, %arg6: memref<2x4x256xf32, #tpu.memory_space<vmem>>) attributes {dimension_semantics = [#tpu.dimension_semantics<parallel>], iteration_bounds = array<i64: 1>, scalar_prefetch = 0 : i64, scratch_operands = 0 : i64, tpu.core_type = #tpu.core_type<tc>, window_params = [{transform_indices = @transform_0, window_bounds = array<i64: 2, 4, 256>}, {transform_indices = @transform_1, window_bounds = array<i64: 2, 4, 1>}, {transform_indices = @transform_2, window_bounds = array<i64: 2, 4, 1>}, {transform_indices = @transform_3, window_bounds = array<i64: 1, 4, 1>}, {transform_indices = @transform_4, window_bounds = array<i64: 1, 4, 1>}, {transform_indices = @transform_5, window_bounds = array<i64: 2, 4, 256>}]} {
    %c0 = arith.constant 0 : index
    %c0_0 = arith.constant 0 : index
    %c0_1 = arith.constant 0 : index
    %0 = vector.load %arg1[%c0, %c0_0, %c0_1] : memref<2x4x256xf32, #tpu.memory_space<vmem>>, vector<2x4x256xf32>
    %cst = arith.constant dense<0.000000e+00> : vector<2x4xf32>
    %1 = vector.multi_reduction <add>, %0, %cst [2] : vector<2x4x256xf32> to vector<2x4xf32>
    %2 = vector.shape_cast %1 : vector<2x4xf32> to vector<2x4x1xf32>
    %3 = arith.mulf %0, %0 : vector<2x4x256xf32>
    %cst_2 = arith.constant dense<0.000000e+00> : vector<2x4xf32>
    %4 = vector.multi_reduction <add>, %3, %cst_2 [2] : vector<2x4x256xf32> to vector<2x4xf32>
    %5 = vector.shape_cast %4 : vector<2x4xf32> to vector<2x4x1xf32>
    %cst_3 = arith.constant 3.906250e-03 : f32
    %6 = vector.broadcast %cst_3 : f32 to vector<2x4x1xf32>
    %7 = arith.mulf %2, %6 : vector<2x4x1xf32>
    %cst_4 = arith.constant 2.560000e+02 : f32
    %8 = vector.broadcast %cst_4 : f32 to vector<2x4x1xf32>
    %9 = arith.mulf %8, %7 : vector<2x4x1xf32>
    %10 = arith.mulf %9, %7 : vector<2x4x1xf32>
    %11 = arith.subf %5, %10 : vector<2x4x1xf32>
    %cst_5 = arith.constant 0.000000e+00 : f32
    %12 = vector.broadcast %cst_5 : f32 to vector<2x4x1xf32>
    %13 = arith.maximumf %11, %12 : vector<2x4x1xf32>
    %cst_6 = arith.constant 0.00392156886 : f32
    %14 = vector.broadcast %cst_6 : f32 to vector<2x4x1xf32>
    %15 = arith.mulf %13, %14 : vector<2x4x1xf32>
    %c0_7 = arith.constant 0 : index
    %c0_8 = arith.constant 0 : index
    %c0_9 = arith.constant 0 : index
    %16 = vector.load %arg2[%c0_7, %c0_8, %c0_9] : memref<2x4x1xf32, #tpu.memory_space<vmem>>, vector<2x4x1xf32>
    %c0_10 = arith.constant 0 : index
    %c0_11 = arith.constant 0 : index
    %c0_12 = arith.constant 0 : index
    %17 = vector.load %arg3[%c0_10, %c0_11, %c0_12] : memref<2x4x1xf32, #tpu.memory_space<vmem>>, vector<2x4x1xf32>
    %c0_13 = arith.constant 0 : index
    %c0_14 = arith.constant 0 : index
    %c0_15 = arith.constant 0 : index
    %18 = vector.load %arg4[%c0_13, %c0_14, %c0_15] : memref<1x4x1xf32, #tpu.memory_space<vmem>>, vector<1x4x1xf32>
    %c0_16 = arith.constant 0 : index
    %c0_17 = arith.constant 0 : index
    %c0_18 = arith.constant 0 : index
    %19 = vector.load %arg5[%c0_16, %c0_17, %c0_18] : memref<1x4x1xf32, #tpu.memory_space<vmem>>, vector<1x4x1xf32>
    %cst_19 = arith.constant 9.99999997E-7 : f32
    %20 = vector.broadcast %cst_19 : f32 to vector<2x4x1xf32>
    %21 = arith.addf %15, %20 : vector<2x4x1xf32>
    %22 = math.sqrt %21 : vector<2x4x1xf32>
    %cst_20 = arith.constant dense<0.000000e+00> : vector<4x1xf32>
    %23 = vector.multi_reduction <add>, %7, %cst_20 [0] : vector<2x4x1xf32> to vector<4x1xf32>
    %24 = vector.shape_cast %23 : vector<4x1xf32> to vector<1x4x1xf32>
    %cst_21 = arith.constant 2.000000e+00 : f32
    %25 = vector.broadcast %cst_21 : f32 to vector<1x4x1xf32>
    %26 = arith.divf %24, %25 : vector<1x4x1xf32>
    %27 = vector.broadcast %26 : vector<1x4x1xf32> to vector<2x4x1xf32>
    %28 = arith.subf %7, %27 : vector<2x4x1xf32>
    %29 = arith.mulf %28, %28 : vector<2x4x1xf32>
    %cst_22 = arith.constant dense<0.000000e+00> : vector<4x1xf32>
    %30 = vector.multi_reduction <add>, %29, %cst_22 [0] : vector<2x4x1xf32> to vector<4x1xf32>
    %31 = vector.shape_cast %30 : vector<4x1xf32> to vector<1x4x1xf32>
    %cst_23 = arith.constant 1.000000e+00 : f32
    %32 = vector.broadcast %cst_23 : f32 to vector<1x4x1xf32>
    %33 = arith.divf %31, %32 : vector<1x4x1xf32>
    %cst_24 = arith.constant 9.99999997E-7 : f32
    %34 = vector.broadcast %cst_24 : f32 to vector<1x4x1xf32>
    %35 = arith.addf %33, %34 : vector<1x4x1xf32>
    %36 = math.sqrt %35 : vector<1x4x1xf32>
    %cst_25 = arith.constant dense<0.000000e+00> : vector<4x1xf32>
    %37 = vector.multi_reduction <add>, %22, %cst_25 [0] : vector<2x4x1xf32> to vector<4x1xf32>
    %38 = vector.shape_cast %37 : vector<4x1xf32> to vector<1x4x1xf32>
    %cst_26 = arith.constant 2.000000e+00 : f32
    %39 = vector.broadcast %cst_26 : f32 to vector<1x4x1xf32>
    %40 = arith.divf %38, %39 : vector<1x4x1xf32>
    %41 = vector.broadcast %40 : vector<1x4x1xf32> to vector<2x4x1xf32>
    %42 = arith.subf %22, %41 : vector<2x4x1xf32>
    %43 = arith.mulf %42, %42 : vector<2x4x1xf32>
    %cst_27 = arith.constant dense<0.000000e+00> : vector<4x1xf32>
    %44 = vector.multi_reduction <add>, %43, %cst_27 [0] : vector<2x4x1xf32> to vector<4x1xf32>
    %45 = vector.shape_cast %44 : vector<4x1xf32> to vector<1x4x1xf32>
    %cst_28 = arith.constant 1.000000e+00 : f32
    %46 = vector.broadcast %cst_28 : f32 to vector<1x4x1xf32>
    %47 = arith.divf %45, %46 : vector<1x4x1xf32>
    %cst_29 = arith.constant 9.99999997E-7 : f32
    %48 = vector.broadcast %cst_29 : f32 to vector<1x4x1xf32>
    %49 = arith.addf %47, %48 : vector<1x4x1xf32>
    %50 = math.sqrt %49 : vector<1x4x1xf32>
    %51 = vector.broadcast %36 : vector<1x4x1xf32> to vector<2x4x1xf32>
    %52 = arith.mulf %16, %51 : vector<2x4x1xf32>
    %53 = arith.addf %7, %52 : vector<2x4x1xf32>
    %54 = vector.broadcast %50 : vector<1x4x1xf32> to vector<2x4x1xf32>
    %55 = arith.mulf %17, %54 : vector<2x4x1xf32>
    %56 = arith.addf %22, %55 : vector<2x4x1xf32>
    %cst_30 = arith.constant 9.99999997E-7 : f32
    %57 = vector.broadcast %cst_30 : f32 to vector<2x4x1xf32>
    %58 = arith.addf %15, %57 : vector<2x4x1xf32>
    %59 = math.rsqrt %58 : vector<2x4x1xf32>
    %60 = arith.mulf %56, %59 : vector<2x4x1xf32>
    %61 = arith.mulf %7, %60 : vector<2x4x1xf32>
    %62 = arith.subf %53, %61 : vector<2x4x1xf32>
    %cst_31 = arith.constant dense<0.000000e+00> : vector<4x1xf32>
    %63 = vector.multi_reduction <add>, %53, %cst_31 [0] : vector<2x4x1xf32> to vector<4x1xf32>
    %64 = vector.shape_cast %63 : vector<4x1xf32> to vector<1x4x1xf32>
    %cst_32 = arith.constant 2.000000e+00 : f32
    %65 = vector.broadcast %cst_32 : f32 to vector<1x4x1xf32>
    %66 = arith.divf %64, %65 : vector<1x4x1xf32>
    %cst_33 = arith.constant 0.99609375 : f32
    %67 = vector.broadcast %cst_33 : f32 to vector<2x4x1xf32>
    %68 = arith.mulf %15, %67 : vector<2x4x1xf32>
    %69 = arith.mulf %60, %60 : vector<2x4x1xf32>
    %70 = arith.mulf %69, %68 : vector<2x4x1xf32>
    %71 = vector.broadcast %66 : vector<1x4x1xf32> to vector<2x4x1xf32>
    %72 = arith.subf %53, %71 : vector<2x4x1xf32>
    %73 = arith.mulf %72, %72 : vector<2x4x1xf32>
    %74 = arith.addf %70, %73 : vector<2x4x1xf32>
    %cst_34 = arith.constant dense<0.000000e+00> : vector<4x1xf32>
    %75 = vector.multi_reduction <add>, %74, %cst_34 [0] : vector<2x4x1xf32> to vector<4x1xf32>
    %76 = vector.shape_cast %75 : vector<4x1xf32> to vector<1x4x1xf32>
    %cst_35 = arith.constant 2.000000e+00 : f32
    %77 = vector.broadcast %cst_35 : f32 to vector<1x4x1xf32>
    %78 = arith.divf %76, %77 : vector<1x4x1xf32>
    %cst_36 = arith.constant 9.99999974E-6 : f32
    %79 = vector.broadcast %cst_36 : f32 to vector<1x4x1xf32>
    %80 = arith.addf %78, %79 : vector<1x4x1xf32>
    %81 = math.rsqrt %80 : vector<1x4x1xf32>
    %82 = vector.broadcast %81 : vector<1x4x1xf32> to vector<2x4x1xf32>
    %83 = arith.mulf %60, %82 : vector<2x4x1xf32>
    %84 = vector.broadcast %18 : vector<1x4x1xf32> to vector<2x4x1xf32>
    %85 = arith.mulf %83, %84 : vector<2x4x1xf32>
    %86 = vector.broadcast %66 : vector<1x4x1xf32> to vector<2x4x1xf32>
    %87 = arith.subf %62, %86 : vector<2x4x1xf32>
    %88 = vector.broadcast %81 : vector<1x4x1xf32> to vector<2x4x1xf32>
    %89 = arith.mulf %87, %88 : vector<2x4x1xf32>
    %90 = vector.broadcast %18 : vector<1x4x1xf32> to vector<2x4x1xf32>
    %91 = arith.mulf %89, %90 : vector<2x4x1xf32>
    %92 = vector.broadcast %19 : vector<1x4x1xf32> to vector<2x4x1xf32>
    %93 = arith.addf %91, %92 : vector<2x4x1xf32>
    %94 = vector.broadcast %85 : vector<2x4x1xf32> to vector<2x4x256xf32>
    %95 = arith.mulf %0, %94 : vector<2x4x256xf32>
    %96 = vector.broadcast %93 : vector<2x4x1xf32> to vector<2x4x256xf32>
    %97 = arith.addf %95, %96 : vector<2x4x256xf32>
    %c0_37 = arith.constant 0 : index
    %c0_38 = arith.constant 0 : index
    %c0_39 = arith.constant 0 : index
    %98 = vector.load %arg6[%c0_37, %c0_38, %c0_39] : memref<2x4x256xf32, #tpu.memory_space<vmem>>, vector<2x4x256xf32>
    tpu.vector_store %arg6[%c0_37, %c0_38, %c0_39], %97 {strides = array<i32>} : memref<2x4x256xf32, #tpu.memory_space<vmem>>, vector<2x4x256xf32>,
    return
  }
  func.func @transform_0(%arg0: i32) -> (i32, i32, i32) {
    %c0_i32 = arith.constant 0 : i32
    %c0_i32_0 = arith.constant 0 : i32
    %c0_i32_1 = arith.constant 0 : i32
    return %c0_i32, %arg0, %c0_i32_0 : i32, i32, i32
  }
  func.func @transform_1(%arg0: i32) -> (i32, i32, i32) {
    %c0_i32 = arith.constant 0 : i32
    %c0_i32_0 = arith.constant 0 : i32
    %c0_i32_1 = arith.constant 0 : i32
    return %c0_i32, %arg0, %c0_i32_0 : i32, i32, i32
  }
  func.func @transform_2(%arg0: i32) -> (i32, i32, i32) {
    %c0_i32 = arith.constant 0 : i32
    %c0_i32_0 = arith.constant 0 : i32
    %c0_i32_1 = arith.constant 0 : i32
    return %c0_i32, %arg0, %c0_i32_0 : i32, i32, i32
  }
  func.func @transform_3(%arg0: i32) -> (i32, i32, i32) {
    %c0_i32 = arith.constant 0 : i32
    %c0_i32_0 = arith.constant 0 : i32
    %c0_i32_1 = arith.constant 0 : i32
    return %c0_i32, %arg0, %c0_i32_0 : i32, i32, i32
  }
  func.func @transform_4(%arg0: i32) -> (i32, i32, i32) {
    %c0_i32 = arith.constant 0 : i32
    %c0_i32_0 = arith.constant 0 : i32
    %c0_i32_1 = arith.constant 0 : i32
    return %c0_i32, %arg0, %c0_i32_0 : i32, i32, i32
  }
  func.func @transform_5(%arg0: i32) -> (i32, i32, i32) {
    %c0_i32 = arith.constant 0 : i32
    %c0_i32_0 = arith.constant 0 : i32
    %c0_i32_1 = arith.constant 0 : i32
    return %c0_i32, %arg0, %c0_i32_0 : i32, i32, i32
  }
}

</mosaic_0001>

<llo_original>
// kernel: tpu_custom_call.1
$region0: #{tpu_custom_call.1}
  #allocation0 [shape = 'u32[]', space=smem, size = 0x4, offset = 0x4, fixed_abs, tag = 'smem constant byte address 0x4 - core index']
  #allocation1 [shape = 'u32[144,128]{1,0:T(1,128)}', space=vmem, size = 0x12000, scoped, tag = 'internal scratch']
  %s0 = inlined_call_operand.vmem [shape: f32[2,4,256], index: 0, kind: input, shape index: {}]
  %s1 = inlined_call_operand.vmem [shape: f32[2,4,1], index: 1, kind: input, shape index: {}]
  %s2 = inlined_call_operand.vmem [shape: f32[2,4,1], index: 2, kind: input, shape index: {}]
  %s3 = inlined_call_operand.vmem [shape: f32[1,4,1], index: 3, kind: input, shape index: {}]
  %s4 = inlined_call_operand.vmem [shape: f32[1,4,1], index: 4, kind: input, shape index: {}]
  %s5 = inlined_call_operand.hbm [shape: f32[2,4,256], index: 5, kind: output, shape index: {}]
  %s6 = sld [smem:[#allocation0]]
  $region30: #{tpu_custom_call.1} parent=0
    _
  %s8 = ssub.s32 1, %s6
  %s9 = scalar_select 0, %s8, %s6
  $region1: #{tpu_custom_call.1} parent=0
    #allocation2 [shape = 'u8[8192]{0}', space=vmem, size = 0x2000, scoped, tag = 'output window, operand 0, single buffered']
    #allocation3 [shape = 's32[1]{0}', space=sflag, size = 0x4, scoped, tag = 'scoped memory for tpu_custom_call.1']
    %10 = vsyncpa [#allocation3], 0
    // Predicated region
    $region2: #{tpu_custom_call.1} parent=1 // pred_check
      _
    $region3: #{tpu_custom_call.1} parent=1 // pred_check_branch
      %12 = sbr.rel (0) target = $region5
    $region4: #{tpu_custom_call.1} parent=1 // pred_region
      _
    $region5: #{tpu_custom_call.1} parent=1 // pred_fallthru
      _
    // Predicated region
    $region6: #{tpu_custom_call.1} parent=1 // pred_check
      _
    $region7: #{tpu_custom_call.1} parent=1 // pred_check_branch
      %14 = sbr.rel (0) target = $region9
    $region8: #{tpu_custom_call.1} parent=1 // pred_region
      _
    $region9: #{tpu_custom_call.1} parent=1 // pred_fallthru
      _
    // Predicated region
    $region10: #{tpu_custom_call.1} parent=1 // pred_check
      _
    $region11: #{tpu_custom_call.1} parent=1 // pred_check_branch
      %16 = sbr.rel (0) target = $region13
    $region12: #{tpu_custom_call.1} parent=1 // pred_region
      _
    $region13: #{tpu_custom_call.1} parent=1 // pred_fallthru
      _
    // Predicated region
    $region14: #{tpu_custom_call.1} parent=1 // pred_check
      _
    $region15: #{tpu_custom_call.1} parent=1 // pred_check_branch
      %18 = sbr.rel (0) target = $region17
    $region16: #{tpu_custom_call.1} parent=1 // pred_region
      _
    $region17: #{tpu_custom_call.1} parent=1 // pred_fallthru
      _
    // Predicated region
    $region18: #{tpu_custom_call.1} parent=1 // pred_check
      _
    $region19: #{tpu_custom_call.1} parent=1 // pred_check_branch
      %20 = sbr.rel (0) target = $region21
    $region20: #{tpu_custom_call.1} parent=1 // pred_region
      _
    $region21: #{tpu_custom_call.1} parent=1 // pred_fallthru
      _
    %v21 = vld [vmem:[%s0] sm:$0xff]
    %v22 = vld [vmem:[%s0 + $0x8] sm:$0xff]
    %v25 = vcombine.high %v21, %v21
    %v26 = vcombine.high %v22, %v22
    %vm29 = vcmask 1043456
    %v30 = vsel %vm29, %v21, 0.0
    %v31 = vsel %vm29, %v25, 0.0
    %v32 = vadd.f32 %v30, %v31
    %33 = vadd.xlane.f32.xlu0 %v32
    %v34 = vpop.xlane.xlu0 %33
    %v35 = vsel %vm29, %v22, 0.0
    %v36 = vsel %vm29, %v26, 0.0
    %v37 = vadd.f32 %v35, %v36
    %38 = vadd.xlane.f32.xlu0 %v37
    %v39 = vpop.xlane.xlu0 %38
    %v40 = vmul.f32 %v21, %v21
    %v41 = vmul.f32 %v22, %v22
    %v44 = vcombine.high %v40, %v40
    %v45 = vcombine.high %v41, %v41
    %v48 = vsel %vm29, %v40, 0.0
    %v49 = vsel %vm29, %v44, 0.0
    %v50 = vadd.f32 %v48, %v49
    %51 = vadd.xlane.f32.xlu0 %v50
    %v52 = vpop.xlane.xlu0 %51
    %v53 = vsel %vm29, %v41, 0.0
    %v54 = vsel %vm29, %v45, 0.0
    %v55 = vadd.f32 %v53, %v54
    %56 = vadd.xlane.f32.xlu0 %v55
    %v57 = vpop.xlane.xlu0 %56
    %v58 = vmul.f32 %v34, 0.00390625
    %v59 = vmul.f32 %v39, 0.00390625
    %v60 = vmul.f32 %v58, 256.0
    %v61 = vmul.f32 %v59, 256.0
    %v62 = vmul.f32 %v60, %v58
    %v63 = vmul.f32 %v61, %v59
    %v64 = vsub.f32 %v52, %v62
    %v65 = vsub.f32 %v57, %v63
    %v66 = vmax.f32 %v64, 0.0
    %v67 = vmax.f32 %v65, 0.0
    %v68 = vmul.f32 %v66, 0.003921569
    %v69 = vmul.f32 %v67, 0.003921569
    %v70 = vld [vmem:[%s1] sm:$0xf]
    %v71 = vld [vmem:[%s1 + $0x4] sm:$0xf]
    %v72 = vld [vmem:[%s2] sm:$0xf]
    %v73 = vld [vmem:[%s2 + $0x4] sm:$0xf]
    %v74 = vld [vmem:[%s3] sm:$0xf]
    %v75 = vld [vmem:[%s4] sm:$0xf]
    %v76 = vadd.f32 %v68, 1e-06
    %v77 = vadd.f32 %v69, 1e-06
    %v78 = vrsqrt.pop %v76
    %v79 = vmul.f32 %v76, %v78
    %vm80 = vcmp.eq.f32.partialorder %v76, inf
    %v81 = vsel %vm80, %v76, %v79
    %vm82 = vcmp.eq.f32.partialorder %v76, 0.0
    %v83 = vand.u32 %v76, 2147483648
    %v84 = vsel %vm82, %v83, %v81
    %v85 = vrsqrt.pop %v77
    %v86 = vmul.f32 %v77, %v85
    %vm87 = vcmp.eq.f32.partialorder %v77, inf
    %v88 = vsel %vm87, %v77, %v86
    %vm89 = vcmp.eq.f32.partialorder %v77, 0.0
    %v90 = vand.u32 %v77, 2147483648
    %v91 = vsel %vm89, %v90, %v88
    %v92 = vsel %vm29, %v58, 0.0
    %v93 = vsel %vm29, %v59, 0.0
    %v94 = vadd.f32 %v92, %v93
    %v95 = vrcp.pop 2.0
    %v96 = vmul.f32 %v94, %v95
    %v97 = vsub.f32 %v58, %v96
    %v98 = vsub.f32 %v59, %v96
    %v99 = vmul.f32 %v97, %v97
    %v100 = vmul.f32 %v98, %v98
    %v101 = vsel %vm29, %v99, 0.0
    %v102 = vsel %vm29, %v100, 0.0
    %v103 = vadd.f32 %v101, %v102
    %v104 = vadd.f32 %v103, 1e-06
    %v105 = vrsqrt.pop %v104
    %v106 = vmul.f32 %v104, %v105
    %vm107 = vcmp.eq.f32.partialorder %v104, inf
    %v108 = vsel %vm107, %v104, %v106
    %vm109 = vcmp.eq.f32.partialorder %v104, 0.0
    %v110 = vand.u32 %v104, 2147483648
    %v111 = vsel %vm109, %v110, %v108
    %v112 = vsel %vm29, %v84, 0.0
    %v113 = vsel %vm29, %v91, 0.0
    %v114 = vadd.f32 %v112, %v113
    %v115 = vmul.f32 %v114, %v95
    %v116 = vsub.f32 %v84, %v115
    %v117 = vsub.f32 %v91, %v115
    %v118 = vmul.f32 %v116, %v116
    %v119 = vmul.f32 %v117, %v117
    %v120 = vsel %vm29, %v118, 0.0
    %v121 = vsel %vm29, %v119, 0.0
    %v122 = vadd.f32 %v120, %v121
    %v123 = vadd.f32 %v122, 1e-06
    %v124 = vrsqrt.pop %v123
    %v125 = vmul.f32 %v123, %v124
    %vm126 = vcmp.eq.f32.partialorder %v123, inf
    %v127 = vsel %vm126, %v123, %v125
    %vm128 = vcmp.eq.f32.partialorder %v123, 0.0
    %v129 = vand.u32 %v123, 2147483648
    %v130 = vsel %vm128, %v129, %v127
    %v131 = vmul.f32 %v70, %v111
    %v132 = vmul.f32 %v71, %v111
    %v133 = vadd.f32 %v58, %v131
    %v134 = vadd.f32 %v59, %v132
    %v135 = vmul.f32 %v72, %v130
    %v136 = vmul.f32 %v73, %v130
    %v137 = vadd.f32 %v84, %v135
    %v138 = vadd.f32 %v91, %v136
    %v139 = vrsqrt.pop %v76
    %v140 = vrsqrt.pop %v77
    %v141 = vmul.f32 %v137, %v139
    %v142 = vmul.f32 %v138, %v140
    %v143 = vmul.f32 %v58, %v141
    %v144 = vmul.f32 %v59, %v142
    %v145 = vsub.f32 %v133, %v143
    %v146 = vsub.f32 %v134, %v144
    %vm147 = vcmask 3072
    %v148 = vsel %vm147, %v133, 0.0
    %v149 = vsel %vm147, %v134, 0.0
    %v150 = vadd.f32 %v148, %v149
    %v151 = vmul.f32 %v150, %v95
    %v152 = vmul.f32 %v68, 0.99609375
    %v153 = vmul.f32 %v69, 0.99609375
    %v154 = vmul.f32 %v141, %v141
    %v155 = vmul.f32 %v142, %v142
    %v156 = vmul.f32 %v154, %v152
    %v157 = vmul.f32 %v155, %v153
    %v158 = vsub.f32 %v133, %v151
    %v159 = vsub.f32 %v134, %v151
    %v160 = vmul.f32 %v158, %v158
    %v161 = vmul.f32 %v159, %v159
    %v162 = vadd.f32 %v156, %v160
    %v163 = vadd.f32 %v157, %v161
    %v164 = vsel %vm147, %v162, 0.0
    %v165 = vsel %vm147, %v163, 0.0
    %v166 = vadd.f32 %v164, %v165
    %v167 = vmul.f32 %v166, %v95
    %v168 = vadd.f32 %v167, 1e-05
    %v169 = vrsqrt.pop %v168
    %v170 = vmul.f32 %v141, %v169
    %v171 = vmul.f32 %v142, %v169
    %v172 = vmul.f32 %v170, %v74
    %v173 = vmul.f32 %v171, %v74
    %v174 = vsub.f32 %v145, %v151
    %v175 = vsub.f32 %v146, %v151
    %v176 = vmul.f32 %v174, %v169
    %v177 = vmul.f32 %v175, %v169
    %v178 = vmul.f32 %v176, %v74
    %v179 = vmul.f32 %v177, %v74
    %v180 = vadd.f32 %v178, %v75
    %v181 = vadd.f32 %v179, %v75
    %183 = vset.pattern.permute.xlu0 0
    %184 = vperm.xlu0 %183, %v172
    %v185 = vpop.permute.xlu0 %184
    %187 = vset.pattern.permute.xlu0 0
    %188 = vperm.xlu0 %187, %v173
    %v189 = vpop.permute.xlu0 %188
    %v191 = vunpack.c.l.s4 839922192
    %v192 = vunpack.c.0.s8 %v191
    %v193 = vlaneseq
    %v194 = vshrl.u32 %v193, 7
    %v195 = vsub.s32 %v192, %v194
    %v196 = vrot.slane %v185, %v195
    %v198 = vunpack.c.l.s4 839922192
    %v199 = vunpack.c.0.s8 %v198
    %v200 = vlaneseq
    %v201 = vshrl.u32 %v200, 7
    %v202 = vsub.s32 %v199, %v201
    %v203 = vrot.slane %v189, %v202
    %v206 = vmul.f32 %v21, %v196
    %v207 = vmul.f32 %v22, %v203
    %209 = vset.pattern.permute.xlu0 0
    %210 = vperm.xlu0 %209, %v180
    %v211 = vpop.permute.xlu0 %210
    %213 = vset.pattern.permute.xlu0 0
    %214 = vperm.xlu0 %213, %v181
    %v215 = vpop.permute.xlu0 %214
    %v217 = vunpack.c.l.s4 839922192
    %v218 = vunpack.c.0.s8 %v217
    %v219 = vlaneseq
    %v220 = vshrl.u32 %v219, 7
    %v221 = vsub.s32 %v218, %v220
    %v222 = vrot.slane %v211, %v221
    %v224 = vunpack.c.l.s4 839922192
    %v225 = vunpack.c.0.s8 %v224
    %v226 = vlaneseq
    %v227 = vshrl.u32 %v226, 7
    %v228 = vsub.s32 %v225, %v227
    %v229 = vrot.slane %v215, %v228
    %v232 = vadd.f32 %v206, %v222
    %v233 = vadd.f32 %v207, %v229
    %234 = vst [vmem:[#allocation2] sm:$0xff] %v232
    %235 = vst [vmem:[#allocation2 + $0x8] sm:$0xff] %v233
    // Predicated region
    $region22: #{tpu_custom_call.1} parent=1 // pred_check
      _
    $region23: #{tpu_custom_call.1} parent=1 // pred_check_branch
      %237 = sbr.rel (0) target = $region25
    $region24: #{tpu_custom_call.1} parent=1 // pred_region
      %s239 = ssub.s32 256, 256
      %240 = vsyncadd [#allocation3], %s239
      %s241 = sshll.u32 [#allocation2], 4
      %s242 = int_to_ptr.vmem [resolvable:$true] %s241
      %247 = dma.vmem_to_hbm [thread:$0]  %s242, 256, %s5, [#allocation3], 128, 128, 8
    $region25: #{tpu_custom_call.1} parent=1 // pred_fallthru
      _
    // Predicated region
    $region26: #{tpu_custom_call.1} parent=1 // pred_check
      _
    $region27: #{tpu_custom_call.1} parent=1 // pred_check_branch
      %249 = sbr.rel (0) target = $region29
    $region28: #{tpu_custom_call.1} parent=1 // pred_region
      %250 = dma.done [#allocation3], 256
    $region29: #{tpu_custom_call.1} parent=1 // pred_fallthru
      _
    %251 = vsyncpa [#allocation3], 1

</llo_original>
